<compile_context>
chip_gen: v5e
topology: v5e:2x2
jax: 0.10.0
libtpu: 0.0.40
codegen_flags: <defaults>
</compile_context>

<pallas_src>
import functools

import jax
import jax.numpy as jnp
import numpy as np
from jax.experimental import pallas as pl
from jax.experimental.pallas import tpu as pltpu


_TS_TARGET = 32768                   # spatial lanes per DMA block (multiple of _CHUNK)
_CHUNK = 512                         # lanes per in-register compute chunk (multiple of 128)
_VMEM_LIMIT = 32 * 1024 * 1024       # safe on v5e/v6e (128 MiB) and v7x (64 MiB) physical VMEM
_INPUT_BUDGET = 12 * 1024 * 1024     # double-buffered activation block budget within the limit


def _dice_sums_kernel(net_ref, lab_ref, sy_ref, ss_ref, si_ref, *,
                      S, TS, CH, apply_softmax, needs_mask):
    s = pl.program_id(1)
    nchunks = TS // CH                      # static
    C = net_ref.shape[1]

    # Zero this batch-row's accumulators on the first spatial tile.
    @pl.when(s == 0)
    def _init():
        sy_ref[...] = jnp.zeros_like(sy_ref)
        ss_ref[...] = jnp.zeros_like(ss_ref)
        si_ref[...] = jnp.zeros_like(si_ref)

    # Tiny (C, 1) channel-id column, broadcast-compared against the (1, CH)
    # label row -> no materialized (C, TS) iota.
    c_ids = jax.lax.broadcasted_iota(jnp.int32, (C, 1), 0)

    def chunk_sums(k, masked):
        off = pl.multiple_of(k * CH, CH)
        x = net_ref[0, :, pl.ds(off, CH)].astype(jnp.float32)      # (C, CH)
        lab = lab_ref[0, :, pl.ds(off, CH)].astype(jnp.int32)      # (1, CH)

        if apply_softmax:
            x_max = jnp.max(x, axis=0, keepdims=True)
            e_x = jnp.exp(x - x_max)
            inv = pl.reciprocal(jnp.sum(e_x, axis=0, keepdims=True), approx=False)
            p = e_x * inv                                          # channel softmax
        else:
            p = x                                                  # apply_nonlin=None path

        hit = c_ids == lab                                         # (C, CH) implicit one-hot

        if masked:
            # Only the last spatial tile reaches this branch: mask the ragged
            # (out-of-bounds, unspecified-content) tail lanes.
            col = jax.lax.broadcasted_iota(jnp.int32, (1, CH), 1)
            valid = (s * TS + off + col) < S                       # (1, CH)
            hit = jnp.logical_and(hit, valid)
            p_s = jnp.where(valid, p, 0.0)
        else:
            p_s = p

        d_y = jnp.sum(hit.astype(jnp.float32), axis=1)[None, :]    # (1, C)
        d_s = jnp.sum(p_s, axis=1)[None, :]                        # (1, C)
        d_i = jnp.sum(jnp.where(hit, p, 0.0), axis=1)[None, :]     # (1, C)
        return d_y, d_s, d_i

    def accumulate(masked):
        def body(k, carry):
            ay, as_, ai = carry
            dy, ds_, di = chunk_sums(k, masked)
            return ay + dy, as_ + ds_, ai + di

        zeros = jnp.zeros((1, C), jnp.float32)
        ay, as_, ai = jax.lax.fori_loop(0, nchunks, body,
                                        (zeros, zeros, zeros),
                                        unroll=min(4, nchunks))
        # Direct accumulate into this batch-row's (1, 1, C) resident output block.
        sy_ref[0] = sy_ref[0] + ay
        ss_ref[0] = ss_ref[0] + as_
        si_ref[0] = si_ref[0] + ai

    if needs_mask:
        last = pl.num_programs(1) - 1

        @pl.when(s != last)
        def _fast():
            accumulate(masked=False)

        @pl.when(s == last)
        def _tail():
            accumulate(masked=True)
    else:
        accumulate(masked=False)


def _dice_sums(net_flat, lab_flat, *, apply_softmax,
               ts_target=_TS_TARGET, chunk_target=_CHUNK):
    """net_flat: (B, C, S); lab_flat: (B, 1, S) int -> (sum_y, sum_sm, sum_tp), each (B, C) f32."""
    B, C, S = net_flat.shape

    # Chunk: multiple of 128 lanes.  Block TS: multiple of the chunk, clamped
    # so the (chunk-rounded) volume and the VMEM double-buffer budget fit.
    CH = max(128, (int(chunk_target) // 128) * 128)
    TS = max(CH, (int(ts_target) // CH) * CH)
    S_ch = ((S + CH - 1) // CH) * CH
    TS = min(TS, S_ch)
    max_ts = _INPUT_BUDGET // (2 * C * net_flat.dtype.itemsize)
    max_ts = max(CH, (max_ts // CH) * CH)
    TS = min(TS, max_ts)

    n_s = pl.cdiv(S, TS)
    needs_mask = (S % TS) != 0          # only the last tile is ragged
    grid = (B, n_s)

    kernel = functools.partial(_dice_sums_kernel, S=S, TS=TS, CH=CH,
                               apply_softmax=apply_softmax,
                               needs_mask=needs_mask)

    out_shape = tuple(jax.ShapeDtypeStruct((B, 1, C), jnp.float32) for _ in range(3))
    out_spec = pl.BlockSpec((1, 1, C), lambda b, s: (b, 0, 0))

    cost = pl.CostEstimate(
        flops=8 * B * C * S,
        transcendentals=(B * C * S) if apply_softmax else 0,
        bytes_accessed=(B * C * S * net_flat.dtype.itemsize
                        + B * S * lab_flat.dtype.itemsize
                        + 3 * B * C * 4),
    )

    sy, ss, si = pl.pallas_call(
        kernel,
        out_shape=out_shape,
        grid_spec=pltpu.PrefetchScalarGridSpec(
            num_scalar_prefetch=0,
            grid=grid,
            in_specs=[
                pl.BlockSpec((1, C, TS), lambda b, s: (b, 0, s)),
                pl.BlockSpec((1, 1, TS), lambda b, s: (b, 0, s)),
            ],
            out_specs=[out_spec, out_spec, out_spec],
        ),
        compiler_params=pltpu.CompilerParams(
            dimension_semantics=("parallel", "arbitrary"),   # batch parallel, spatial reduction
            vmem_limit_bytes=_VMEM_LIMIT,
        ),
        cost_estimate=cost,
    )(net_flat, lab_flat)
    return sy[:, 0, :], ss[:, 0, :], si[:, 0, :]


@functools.partial(jax.jit, static_argnames=(
    "apply_softmax", "batch_dice", "do_bg", "smooth", "square",
    "ts_target", "chunk_target"))
def soft_dice_loss(x, y, *, apply_softmax=True, batch_dice=False, do_bg=True,
                   smooth=1.0, square=False,
                   ts_target=_TS_TARGET, chunk_target=_CHUNK):
    """SoftDiceLoss.forward.

    x: (B, C, *spatial) logits (apply_softmax=True ~ apply_nonlin=softmax_helper)
       or probabilities (apply_softmax=False ~ apply_nonlin=None).
    y: (B, *spatial) or (B, 1, *spatial) integer label map, values in [0, C).
    """
    if square:
        raise NotImplementedError  # TODO(synk): square=True not implemented
    B, C = x.shape[0], x.shape[1]
    S = int(np.prod(x.shape[2:]))
    net_flat = x.reshape(B, C, S)                              # keep native dtype (bf16 ok)
    # int8 labels: 4x less label traffic.  Assumes labels already in [0, C).
    lab_dtype = jnp.int8 if C < 128 else jnp.int32
    lab_flat = y.reshape(B, 1, S).astype(lab_dtype)

    sum_y, sum_s, sum_i = _dice_sums(net_flat, lab_flat,
                                     apply_softmax=apply_softmax,
                                     ts_target=ts_target, chunk_target=chunk_target)

    tp = sum_i                       # sum p * onehot
    fp = sum_s - sum_i               # sum p * (1 - onehot)
    fn = sum_y - sum_i               # sum (1 - p) * onehot
    if batch_dice:
        tp, fp, fn = tp.sum(0), fp.sum(0), fn.sum(0)
    dc = (2.0 * tp + smooth) / (2.0 * tp + fp + fn + smooth)
    if not do_bg:
        dc = dc[1:] if batch_dice else dc[:, 1:]
    return -jnp.mean(dc)


def _reference(x, y, *, apply_softmax=True, batch_dice=False, do_bg=True, smooth=1.0):
    """Pure-JAX reference mirroring the PyTorch SoftDiceLoss module."""
    C = x.shape[1]
    xf = x.astype(jnp.float32)
    if apply_softmax:
        xf = jax.nn.softmax(xf, axis=1)
    oh = jax.nn.one_hot(y.reshape(x.shape[0], *x.shape[2:]), C, axis=1, dtype=jnp.float32)
    axes = tuple([0] + list(range(2, x.ndim))) if batch_dice else tuple(range(2, x.ndim))
    tp = jnp.sum(xf * oh, axis=axes)
    fp = jnp.sum(xf * (1.0 - oh), axis=axes)
    fn = jnp.sum((1.0 - xf) * oh, axis=axes)
    dc = (2.0 * tp + smooth) / (2.0 * tp + fp + fn + smooth)
    if not do_bg:
        dc = dc[1:] if batch_dice else dc[:, 1:]
    return -jnp.mean(dc)


if __name__ == "__main__":
    key = jax.random.PRNGKey(0)
    k1, k2 = jax.random.split(key)

    # Small shapes; S = 6*10*10 = 600 is NOT a multiple of the tile, so the
    # in-kernel ragged-tail masking path is exercised.  Small ts/chunk force
    # multiple spatial tiles AND multiple inner chunks per tile.
    B, C, X, Y, Z = 2, 4, 6, 10, 10
    x = jax.random.normal(k1, (B, C, X, Y, Z), dtype=jnp.float32)
    y = jax.random.randint(k2, (B, X, Y, Z), 0, C, dtype=jnp.int32)

    # Typical trainer config: apply_nonlin = softmax_helper.  3 tiles x 2 chunks.
    loss = jax.block_until_ready(
        soft_dice_loss(x, y, apply_softmax=True, ts_target=256, chunk_target=128))
    ref = _reference(x, y, apply_softmax=True)
    assert jnp.allclose(loss, ref, atol=1e-5, rtol=1e-5), (loss, ref)

    # Module defaults (apply_nonlin=None) plus batch_dice / do_bg glue variants.
    loss2 = jax.block_until_ready(
        soft_dice_loss(x, y, apply_softmax=False, batch_dice=True, do_bg=False,
                       ts_target=256, chunk_target=128))
    ref2 = _reference(x, y, apply_softmax=False, batch_dice=True, do_bg=False)
    assert jnp.allclose(loss2, ref2, atol=1e-5, rtol=1e-5), (loss2, ref2)

    # Default tiling parameters (single ragged tile, block larger than volume).
    loss3 = jax.block_until_ready(soft_dice_loss(x, y, apply_softmax=True))
    assert jnp.allclose(loss3, ref, atol=1e-5, rtol=1e-5), (loss3, ref)

    print("KERNEL_OK")
</pallas_src>

<mosaic_0001>
module attributes {stable_mosaic.version = 11 : i64} {
  func.func @_dice_sums_kernel(%arg0: i32, %arg1: i32, %arg2: memref<1x4x256xf32, #tpu.memory_space<vmem>>, %arg3: memref<1x1x256xi8, #tpu.memory_space<vmem>>, %arg4: memref<1x1x4xf32, #tpu.memory_space<vmem>>, %arg5: memref<1x1x4xf32, #tpu.memory_space<vmem>>, %arg6: memref<1x1x4xf32, #tpu.memory_space<vmem>>) attributes {dimension_semantics = [#tpu.dimension_semantics<parallel>, #tpu.dimension_semantics<arbitrary>], iteration_bounds = array<i64: 2, 3>, scalar_prefetch = 0 : i64, scratch_operands = 0 : i64, tpu.core_type = #tpu.core_type<tc>, window_params = [{transform_indices = @transform_0, window_bounds = array<i64: 1, 4, 256>}, {transform_indices = @transform_1, window_bounds = array<i64: 1, 1, 256>}, {transform_indices = @transform_2, window_bounds = array<i64: 1, 1, 4>}, {transform_indices = @transform_3, window_bounds = array<i64: 1, 1, 4>}, {transform_indices = @transform_4, window_bounds = array<i64: 1, 1, 4>}]} {
    %c0_i32 = arith.constant 0 : i32
    %0 = arith.cmpi eq, %arg1, %c0_i32 : i32
    %1 = arith.extui %0 : i1 to i32
    %c0_i32_0 = arith.constant 0 : i32
    %2 = arith.cmpi ne, %1, %c0_i32_0 : i32
    scf.if %2 {
      %cst = arith.constant 0.000000e+00 : f32
      %10 = vector.broadcast %cst : f32 to vector<1x1x4xf32>
      %c0 = arith.constant 0 : index
      %c0_4 = arith.constant 0 : index
      %c0_5 = arith.constant 0 : index
      %11 = vector.load %arg4[%c0, %c0_4, %c0_5] : memref<1x1x4xf32, #tpu.memory_space<vmem>>, vector<1x1x4xf32>
      tpu.vector_store %arg4[%c0, %c0_4, %c0_5], %10 {strides = array<i32>} : memref<1x1x4xf32, #tpu.memory_space<vmem>>, vector<1x1x4xf32>,
      %cst_6 = arith.constant 0.000000e+00 : f32
      %12 = vector.broadcast %cst_6 : f32 to vector<1x1x4xf32>
      %c0_7 = arith.constant 0 : index
      %c0_8 = arith.constant 0 : index
      %c0_9 = arith.constant 0 : index
      %13 = vector.load %arg5[%c0_7, %c0_8, %c0_9] : memref<1x1x4xf32, #tpu.memory_space<vmem>>, vector<1x1x4xf32>
      tpu.vector_store %arg5[%c0_7, %c0_8, %c0_9], %12 {strides = array<i32>} : memref<1x1x4xf32, #tpu.memory_space<vmem>>, vector<1x1x4xf32>,
      %cst_10 = arith.constant 0.000000e+00 : f32
      %14 = vector.broadcast %cst_10 : f32 to vector<1x1x4xf32>
      %c0_11 = arith.constant 0 : index
      %c0_12 = arith.constant 0 : index
      %c0_13 = arith.constant 0 : index
      %15 = vector.load %arg6[%c0_11, %c0_12, %c0_13] : memref<1x1x4xf32, #tpu.memory_space<vmem>>, vector<1x1x4xf32>
      tpu.vector_store %arg6[%c0_11, %c0_12, %c0_13], %14 {strides = array<i32>} : memref<1x1x4xf32, #tpu.memory_space<vmem>>, vector<1x1x4xf32>,
    } else {
    }
    %3 = tpu.iota {dimensions = array<i32: 0>} : vector<4x1xi32>
    %c2_i32 = arith.constant 2 : i32
    %4 = arith.cmpi ne, %arg1, %c2_i32 : i32
    %5 = arith.extui %4 : i1 to i32
    %c0_i32_1 = arith.constant 0 : i32
    %6 = arith.cmpi ne, %5, %c0_i32_1 : i32
    scf.if %6 {
      %cst = arith.constant 0.000000e+00 : f32
      %10 = vector.broadcast %cst : f32 to vector<1x4xf32>
      %c0_i32_4 = arith.constant 0 : i32
      %c128_i32 = arith.constant 128 : i32
      %11 = arith.muli %c0_i32_4, %c128_i32 : i32
      %12 = tpu.assume_multiple %11, 128 : i32
      %c0 = arith.constant 0 : index
      %c0_5 = arith.constant 0 : index
      %13 = arith.index_cast %12 : i32 to index
      %14 = vector.load %arg2[%c0, %c0_5, %13] : memref<1x4x256xf32, #tpu.memory_space<vmem>>, vector<1x4x128xf32>
      %15 = vector.shape_cast %14 : vector<1x4x128xf32> to vector<4x128xf32>
      %c0_6 = arith.constant 0 : index
      %c0_7 = arith.constant 0 : index
      %16 = arith.index_cast %12 : i32 to index
      %17 = vector.load %arg3[%c0_6, %c0_7, %16] : memref<1x1x256xi8, #tpu.memory_space<vmem>>, vector<1x1x128xi8>
      %18 = vector.shape_cast %17 : vector<1x1x128xi8> to vector<1x128xi8>
      %19 = arith.extsi %18 : vector<1x128xi8> to vector<1x128xi32>
      %cst_8 = arith.constant dense<0xFF800000> : vector<128xf32>
      %20 = vector.multi_reduction <maximumf>, %15, %cst_8 [0] : vector<4x128xf32> to vector<128xf32>
      %21 = vector.shape_cast %20 : vector<128xf32> to vector<1x128xf32>
      %22 = vector.broadcast %21 : vector<1x128xf32> to vector<4x128xf32>
      %23 = arith.subf %15, %22 : vector<4x128xf32>
      %24 = math.exp %23 : vector<4x128xf32>
      %cst_9 = arith.constant dense<0.000000e+00> : vector<128xf32>
      %25 = vector.multi_reduction <add>, %24, %cst_9 [0] : vector<4x128xf32> to vector<128xf32>
      %26 = vector.shape_cast %25 : vector<128xf32> to vector<1x128xf32>
      %27 = tpu.reciprocal %26 : vector<1x128xf32> -> vector<1x128xf32>
      %28 = vector.broadcast %27 : vector<1x128xf32> to vector<4x128xf32>
      %29 = arith.mulf %24, %28 : vector<4x128xf32>
      %30 = vector.broadcast %3 : vector<4x1xi32> to vector<4x128xi32>
      %31 = vector.broadcast %19 : vector<1x128xi32> to vector<4x128xi32>
      %32 = arith.cmpi eq, %30, %31 : vector<4x128xi32>
      %33 = arith.extui %32 : vector<4x128xi1> to vector<4x128xi32>
      %34 = arith.sitofp %33 : vector<4x128xi32> to vector<4x128xf32>
      %cst_10 = arith.constant dense<0.000000e+00> : vector<4xf32>
      %35 = vector.multi_reduction <add>, %34, %cst_10 [1] : vector<4x128xf32> to vector<4xf32>
      %36 = vector.shape_cast %35 : vector<4xf32> to vector<1x4xf32>
      %cst_11 = arith.constant dense<0.000000e+00> : vector<4xf32>
      %37 = vector.multi_reduction <add>, %29, %cst_11 [1] : vector<4x128xf32> to vector<4xf32>
      %38 = vector.shape_cast %37 : vector<4xf32> to vector<1x4xf32>
      %cst_12 = arith.constant 0.000000e+00 : f32
      %39 = vector.broadcast %cst_12 : f32 to vector<4x128xf32>
      %40 = arith.select %32, %29, %39 : vector<4x128xi1>, vector<4x128xf32>
      %cst_13 = arith.constant dense<0.000000e+00> : vector<4xf32>
      %41 = vector.multi_reduction <add>, %40, %cst_13 [1] : vector<4x128xf32> to vector<4xf32>
      %42 = vector.shape_cast %41 : vector<4xf32> to vector<1x4xf32>
      %43 = arith.addf %10, %36 : vector<1x4xf32>
      %44 = arith.addf %10, %38 : vector<1x4xf32>
      %45 = arith.addf %10, %42 : vector<1x4xf32>
      %c1_i32 = arith.constant 1 : i32
      %c128_i32_14 = arith.constant 128 : i32
      %46 = arith.muli %c1_i32, %c128_i32_14 : i32
      %47 = tpu.assume_multiple %46, 128 : i32
      %c0_15 = arith.constant 0 : index
      %c0_16 = arith.constant 0 : index
      %48 = arith.index_cast %47 : i32 to index
      %49 = vector.load %arg2[%c0_15, %c0_16, %48] : memref<1x4x256xf32, #tpu.memory_space<vmem>>, vector<1x4x128xf32>
      %50 = vector.shape_cast %49 : vector<1x4x128xf32> to vector<4x128xf32>
      %c0_17 = arith.constant 0 : index
      %c0_18 = arith.constant 0 : index
      %51 = arith.index_cast %47 : i32 to index
      %52 = vector.load %arg3[%c0_17, %c0_18, %51] : memref<1x1x256xi8, #tpu.memory_space<vmem>>, vector<1x1x128xi8>
      %53 = vector.shape_cast %52 : vector<1x1x128xi8> to vector<1x128xi8>
      %54 = arith.extsi %53 : vector<1x128xi8> to vector<1x128xi32>
      %cst_19 = arith.constant dense<0xFF800000> : vector<128xf32>
      %55 = vector.multi_reduction <maximumf>, %50, %cst_19 [0] : vector<4x128xf32> to vector<128xf32>
      %56 = vector.shape_cast %55 : vector<128xf32> to vector<1x128xf32>
      %57 = vector.broadcast %56 : vector<1x128xf32> to vector<4x128xf32>
      %58 = arith.subf %50, %57 : vector<4x128xf32>
      %59 = math.exp %58 : vector<4x128xf32>
      %cst_20 = arith.constant dense<0.000000e+00> : vector<128xf32>
      %60 = vector.multi_reduction <add>, %59, %cst_20 [0] : vector<4x128xf32> to vector<128xf32>
      %61 = vector.shape_cast %60 : vector<128xf32> to vector<1x128xf32>
      %62 = tpu.reciprocal %61 : vector<1x128xf32> -> vector<1x128xf32>
      %63 = vector.broadcast %62 : vector<1x128xf32> to vector<4x128xf32>
      %64 = arith.mulf %59, %63 : vector<4x128xf32>
      %65 = vector.broadcast %3 : vector<4x1xi32> to vector<4x128xi32>
      %66 = vector.broadcast %54 : vector<1x128xi32> to vector<4x128xi32>
      %67 = arith.cmpi eq, %65, %66 : vector<4x128xi32>
      %68 = arith.extui %67 : vector<4x128xi1> to vector<4x128xi32>
      %69 = arith.sitofp %68 : vector<4x128xi32> to vector<4x128xf32>
      %cst_21 = arith.constant dense<0.000000e+00> : vector<4xf32>
      %70 = vector.multi_reduction <add>, %69, %cst_21 [1] : vector<4x128xf32> to vector<4xf32>
      %71 = vector.shape_cast %70 : vector<4xf32> to vector<1x4xf32>
      %cst_22 = arith.constant dense<0.000000e+00> : vector<4xf32>
      %72 = vector.multi_reduction <add>, %64, %cst_22 [1] : vector<4x128xf32> to vector<4xf32>
      %73 = vector.shape_cast %72 : vector<4xf32> to vector<1x4xf32>
      %cst_23 = arith.constant 0.000000e+00 : f32
      %74 = vector.broadcast %cst_23 : f32 to vector<4x128xf32>
      %75 = arith.select %67, %64, %74 : vector<4x128xi1>, vector<4x128xf32>
      %cst_24 = arith.constant dense<0.000000e+00> : vector<4xf32>
      %76 = vector.multi_reduction <add>, %75, %cst_24 [1] : vector<4x128xf32> to vector<4xf32>
      %77 = vector.shape_cast %76 : vector<4xf32> to vector<1x4xf32>
      %78 = arith.addf %43, %71 : vector<1x4xf32>
      %79 = arith.addf %44, %73 : vector<1x4xf32>
      %80 = arith.addf %45, %77 : vector<1x4xf32>
      %c2_i32_25 = arith.constant 2 : i32
      %c0_26 = arith.constant 0 : index
      %c0_27 = arith.constant 0 : index
      %c0_28 = arith.constant 0 : index
      %81 = vector.load %arg4[%c0_26, %c0_27, %c0_28] : memref<1x1x4xf32, #tpu.memory_space<vmem>>, vector<1x1x4xf32>
      %82 = vector.shape_cast %81 : vector<1x1x4xf32> to vector<1x4xf32>
      %83 = arith.addf %82, %78 : vector<1x4xf32>
      %c0_29 = arith.constant 0 : index
      %c0_30 = arith.constant 0 : index
      %c0_31 = arith.constant 0 : index
      %84 = vector.load %arg4[%c0_29, %c0_30, %c0_31] : memref<1x1x4xf32, #tpu.memory_space<vmem>>, vector<1x1x4xf32>
      %85 = vector.shape_cast %84 : vector<1x1x4xf32> to vector<1x4xf32>
      %86 = vector.shape_cast %83 : vector<1x4xf32> to vector<1x1x4xf32>
      tpu.vector_store %arg4[%c0_29, %c0_30, %c0_31], %86 {strides = array<i32>} : memref<1x1x4xf32, #tpu.memory_space<vmem>>, vector<1x1x4xf32>,
      %c0_32 = arith.constant 0 : index
      %c0_33 = arith.constant 0 : index
      %c0_34 = arith.constant 0 : index
      %87 = vector.load %arg5[%c0_32, %c0_33, %c0_34] : memref<1x1x4xf32, #tpu.memory_space<vmem>>, vector<1x1x4xf32>
      %88 = vector.shape_cast %87 : vector<1x1x4xf32> to vector<1x4xf32>
      %89 = arith.addf %88, %79 : vector<1x4xf32>
      %c0_35 = arith.constant 0 : index
      %c0_36 = arith.constant 0 : index
      %c0_37 = arith.constant 0 : index
      %90 = vector.load %arg5[%c0_35, %c0_36, %c0_37] : memref<1x1x4xf32, #tpu.memory_space<vmem>>, vector<1x1x4xf32>
      %91 = vector.shape_cast %90 : vector<1x1x4xf32> to vector<1x4xf32>
      %92 = vector.shape_cast %89 : vector<1x4xf32> to vector<1x1x4xf32>
      tpu.vector_store %arg5[%c0_35, %c0_36, %c0_37], %92 {strides = array<i32>} : memref<1x1x4xf32, #tpu.memory_space<vmem>>, vector<1x1x4xf32>,
      %c0_38 = arith.constant 0 : index
      %c0_39 = arith.constant 0 : index
      %c0_40 = arith.constant 0 : index
      %93 = vector.load %arg6[%c0_38, %c0_39, %c0_40] : memref<1x1x4xf32, #tpu.memory_space<vmem>>, vector<1x1x4xf32>
      %94 = vector.shape_cast %93 : vector<1x1x4xf32> to vector<1x4xf32>
      %95 = arith.addf %94, %80 : vector<1x4xf32>
      %c0_41 = arith.constant 0 : index
      %c0_42 = arith.constant 0 : index
      %c0_43 = arith.constant 0 : index
      %96 = vector.load %arg6[%c0_41, %c0_42, %c0_43] : memref<1x1x4xf32, #tpu.memory_space<vmem>>, vector<1x1x4xf32>
      %97 = vector.shape_cast %96 : vector<1x1x4xf32> to vector<1x4xf32>
      %98 = vector.shape_cast %95 : vector<1x4xf32> to vector<1x1x4xf32>
      tpu.vector_store %arg6[%c0_41, %c0_42, %c0_43], %98 {strides = array<i32>} : memref<1x1x4xf32, #tpu.memory_space<vmem>>, vector<1x1x4xf32>,
    } else {
    }
    %c2_i32_2 = arith.constant 2 : i32
    %7 = arith.cmpi eq, %arg1, %c2_i32_2 : i32
    %8 = arith.extui %7 : i1 to i32
    %c0_i32_3 = arith.constant 0 : i32
    %9 = arith.cmpi ne, %8, %c0_i32_3 : i32
    scf.if %9 {
      %cst = arith.constant 0.000000e+00 : f32
      %10 = vector.broadcast %cst : f32 to vector<1x4xf32>
      %c0_i32_4 = arith.constant 0 : i32
      %c128_i32 = arith.constant 128 : i32
      %11 = arith.muli %c0_i32_4, %c128_i32 : i32
      %12 = tpu.assume_multiple %11, 128 : i32
      %c0 = arith.constant 0 : index
      %c0_5 = arith.constant 0 : index
      %13 = arith.index_cast %12 : i32 to index
      %14 = vector.load %arg2[%c0, %c0_5, %13] : memref<1x4x256xf32, #tpu.memory_space<vmem>>, vector<1x4x128xf32>
      %15 = vector.shape_cast %14 : vector<1x4x128xf32> to vector<4x128xf32>
      %c0_6 = arith.constant 0 : index
      %c0_7 = arith.constant 0 : index
      %16 = arith.index_cast %12 : i32 to index
      %17 = vector.load %arg3[%c0_6, %c0_7, %16] : memref<1x1x256xi8, #tpu.memory_space<vmem>>, vector<1x1x128xi8>
      %18 = vector.shape_cast %17 : vector<1x1x128xi8> to vector<1x128xi8>
      %19 = arith.extsi %18 : vector<1x128xi8> to vector<1x128xi32>
      %cst_8 = arith.constant dense<0xFF800000> : vector<128xf32>
      %20 = vector.multi_reduction <maximumf>, %15, %cst_8 [0] : vector<4x128xf32> to vector<128xf32>
      %21 = vector.shape_cast %20 : vector<128xf32> to vector<1x128xf32>
      %22 = vector.broadcast %21 : vector<1x128xf32> to vector<4x128xf32>
      %23 = arith.subf %15, %22 : vector<4x128xf32>
      %24 = math.exp %23 : vector<4x128xf32>
      %cst_9 = arith.constant dense<0.000000e+00> : vector<128xf32>
      %25 = vector.multi_reduction <add>, %24, %cst_9 [0] : vector<4x128xf32> to vector<128xf32>
      %26 = vector.shape_cast %25 : vector<128xf32> to vector<1x128xf32>
      %27 = tpu.reciprocal %26 : vector<1x128xf32> -> vector<1x128xf32>
      %28 = vector.broadcast %27 : vector<1x128xf32> to vector<4x128xf32>
      %29 = arith.mulf %24, %28 : vector<4x128xf32>
      %30 = vector.broadcast %3 : vector<4x1xi32> to vector<4x128xi32>
      %31 = vector.broadcast %19 : vector<1x128xi32> to vector<4x128xi32>
      %32 = arith.cmpi eq, %30, %31 : vector<4x128xi32>
      %33 = tpu.iota {dimensions = array<i32: 1>} : vector<1x128xi32>
      %c256_i32 = arith.constant 256 : i32
      %34 = arith.muli %arg1, %c256_i32 : i32
      %35 = arith.addi %34, %12 : i32
      %36 = vector.broadcast %35 : i32 to vector<1x128xi32>
      %37 = arith.addi %36, %33 : vector<1x128xi32>
      %c600_i32 = arith.constant 600 : i32
      %38 = vector.broadcast %c600_i32 : i32 to vector<1x128xi32>
      %39 = arith.cmpi slt, %37, %38 : vector<1x128xi32>
      %40 = vector.broadcast %39 : vector<1x128xi1> to vector<4x128xi1>
      %41 = arith.andi %32, %40 : vector<4x128xi1>
      %cst_10 = arith.constant 0.000000e+00 : f32
      %42 = vector.shape_cast %39 : vector<1x128xi1> to vector<1x128xi1>
      %43 = vector.broadcast %42 : vector<1x128xi1> to vector<4x128xi1>
      %44 = vector.broadcast %cst_10 : f32 to vector<4x128xf32>
      %45 = arith.select %43, %29, %44 : vector<4x128xi1>, vector<4x128xf32>
      %46 = arith.extui %41 : vector<4x128xi1> to vector<4x128xi32>
      %47 = arith.sitofp %46 : vector<4x128xi32> to vector<4x128xf32>
      %cst_11 = arith.constant dense<0.000000e+00> : vector<4xf32>
      %48 = vector.multi_reduction <add>, %47, %cst_11 [1] : vector<4x128xf32> to vector<4xf32>
      %49 = vector.shape_cast %48 : vector<4xf32> to vector<1x4xf32>
      %cst_12 = arith.constant dense<0.000000e+00> : vector<4xf32>
      %50 = vector.multi_reduction <add>, %45, %cst_12 [1] : vector<4x128xf32> to vector<4xf32>
      %51 = vector.shape_cast %50 : vector<4xf32> to vector<1x4xf32>
      %cst_13 = arith.constant 0.000000e+00 : f32
      %52 = vector.broadcast %cst_13 : f32 to vector<4x128xf32>
      %53 = arith.select %41, %29, %52 : vector<4x128xi1>, vector<4x128xf32>
      %cst_14 = arith.constant dense<0.000000e+00> : vector<4xf32>
      %54 = vector.multi_reduction <add>, %53, %cst_14 [1] : vector<4x128xf32> to vector<4xf32>
      %55 = vector.shape_cast %54 : vector<4xf32> to vector<1x4xf32>
      %56 = arith.addf %10, %49 : vector<1x4xf32>
      %57 = arith.addf %10, %51 : vector<1x4xf32>
      %58 = arith.addf %10, %55 : vector<1x4xf32>
      %c1_i32 = arith.constant 1 : i32
      %c128_i32_15 = arith.constant 128 : i32
      %59 = arith.muli %c1_i32, %c128_i32_15 : i32
      %60 = tpu.assume_multiple %59, 128 : i32
      %c0_16 = arith.constant 0 : index
      %c0_17 = arith.constant 0 : index
      %61 = arith.index_cast %60 : i32 to index
      %62 = vector.load %arg2[%c0_16, %c0_17, %61] : memref<1x4x256xf32, #tpu.memory_space<vmem>>, vector<1x4x128xf32>
      %63 = vector.shape_cast %62 : vector<1x4x128xf32> to vector<4x128xf32>
      %c0_18 = arith.constant 0 : index
      %c0_19 = arith.constant 0 : index
      %64 = arith.index_cast %60 : i32 to index
      %65 = vector.load %arg3[%c0_18, %c0_19, %64] : memref<1x1x256xi8, #tpu.memory_space<vmem>>, vector<1x1x128xi8>
      %66 = vector.shape_cast %65 : vector<1x1x128xi8> to vector<1x128xi8>
      %67 = arith.extsi %66 : vector<1x128xi8> to vector<1x128xi32>
      %cst_20 = arith.constant dense<0xFF800000> : vector<128xf32>
      %68 = vector.multi_reduction <maximumf>, %63, %cst_20 [0] : vector<4x128xf32> to vector<128xf32>
      %69 = vector.shape_cast %68 : vector<128xf32> to vector<1x128xf32>
      %70 = vector.broadcast %69 : vector<1x128xf32> to vector<4x128xf32>
      %71 = arith.subf %63, %70 : vector<4x128xf32>
      %72 = math.exp %71 : vector<4x128xf32>
      %cst_21 = arith.constant dense<0.000000e+00> : vector<128xf32>
      %73 = vector.multi_reduction <add>, %72, %cst_21 [0] : vector<4x128xf32> to vector<128xf32>
      %74 = vector.shape_cast %73 : vector<128xf32> to vector<1x128xf32>
      %75 = tpu.reciprocal %74 : vector<1x128xf32> -> vector<1x128xf32>
      %76 = vector.broadcast %75 : vector<1x128xf32> to vector<4x128xf32>
      %77 = arith.mulf %72, %76 : vector<4x128xf32>
      %78 = vector.broadcast %3 : vector<4x1xi32> to vector<4x128xi32>
      %79 = vector.broadcast %67 : vector<1x128xi32> to vector<4x128xi32>
      %80 = arith.cmpi eq, %78, %79 : vector<4x128xi32>
      %81 = tpu.iota {dimensions = array<i32: 1>} : vector<1x128xi32>
      %c256_i32_22 = arith.constant 256 : i32
      %82 = arith.muli %arg1, %c256_i32_22 : i32
      %83 = arith.addi %82, %60 : i32
      %84 = vector.broadcast %83 : i32 to vector<1x128xi32>
      %85 = arith.addi %84, %81 : vector<1x128xi32>
      %c600_i32_23 = arith.constant 600 : i32
      %86 = vector.broadcast %c600_i32_23 : i32 to vector<1x128xi32>
      %87 = arith.cmpi slt, %85, %86 : vector<1x128xi32>
      %88 = vector.broadcast %87 : vector<1x128xi1> to vector<4x128xi1>
      %89 = arith.andi %80, %88 : vector<4x128xi1>
      %cst_24 = arith.constant 0.000000e+00 : f32
      %90 = vector.shape_cast %87 : vector<1x128xi1> to vector<1x128xi1>
      %91 = vector.broadcast %90 : vector<1x128xi1> to vector<4x128xi1>
      %92 = vector.broadcast %cst_24 : f32 to vector<4x128xf32>
      %93 = arith.select %91, %77, %92 : vector<4x128xi1>, vector<4x128xf32>
      %94 = arith.extui %89 : vector<4x128xi1> to vector<4x128xi32>
      %95 = arith.sitofp %94 : vector<4x128xi32> to vector<4x128xf32>
      %cst_25 = arith.constant dense<0.000000e+00> : vector<4xf32>
      %96 = vector.multi_reduction <add>, %95, %cst_25 [1] : vector<4x128xf32> to vector<4xf32>
      %97 = vector.shape_cast %96 : vector<4xf32> to vector<1x4xf32>
      %cst_26 = arith.constant dense<0.000000e+00> : vector<4xf32>
      %98 = vector.multi_reduction <add>, %93, %cst_26 [1] : vector<4x128xf32> to vector<4xf32>
      %99 = vector.shape_cast %98 : vector<4xf32> to vector<1x4xf32>
      %cst_27 = arith.constant 0.000000e+00 : f32
      %100 = vector.broadcast %cst_27 : f32 to vector<4x128xf32>
      %101 = arith.select %89, %77, %100 : vector<4x128xi1>, vector<4x128xf32>
      %cst_28 = arith.constant dense<0.000000e+00> : vector<4xf32>
      %102 = vector.multi_reduction <add>, %101, %cst_28 [1] : vector<4x128xf32> to vector<4xf32>
      %103 = vector.shape_cast %102 : vector<4xf32> to vector<1x4xf32>
      %104 = arith.addf %56, %97 : vector<1x4xf32>
      %105 = arith.addf %57, %99 : vector<1x4xf32>
      %106 = arith.addf %58, %103 : vector<1x4xf32>
      %c2_i32_29 = arith.constant 2 : i32
      %c0_30 = arith.constant 0 : index
      %c0_31 = arith.constant 0 : index
      %c0_32 = arith.constant 0 : index
      %107 = vector.load %arg4[%c0_30, %c0_31, %c0_32] : memref<1x1x4xf32, #tpu.memory_space<vmem>>, vector<1x1x4xf32>
      %108 = vector.shape_cast %107 : vector<1x1x4xf32> to vector<1x4xf32>
      %109 = arith.addf %108, %104 : vector<1x4xf32>
      %c0_33 = arith.constant 0 : index
      %c0_34 = arith.constant 0 : index
      %c0_35 = arith.constant 0 : index
      %110 = vector.load %arg4[%c0_33, %c0_34, %c0_35] : memref<1x1x4xf32, #tpu.memory_space<vmem>>, vector<1x1x4xf32>
      %111 = vector.shape_cast %110 : vector<1x1x4xf32> to vector<1x4xf32>
      %112 = vector.shape_cast %109 : vector<1x4xf32> to vector<1x1x4xf32>
      tpu.vector_store %arg4[%c0_33, %c0_34, %c0_35], %112 {strides = array<i32>} : memref<1x1x4xf32, #tpu.memory_space<vmem>>, vector<1x1x4xf32>,
      %c0_36 = arith.constant 0 : index
      %c0_37 = arith.constant 0 : index
      %c0_38 = arith.constant 0 : index
      %113 = vector.load %arg5[%c0_36, %c0_37, %c0_38] : memref<1x1x4xf32, #tpu.memory_space<vmem>>, vector<1x1x4xf32>
      %114 = vector.shape_cast %113 : vector<1x1x4xf32> to vector<1x4xf32>
      %115 = arith.addf %114, %105 : vector<1x4xf32>
      %c0_39 = arith.constant 0 : index
      %c0_40 = arith.constant 0 : index
      %c0_41 = arith.constant 0 : index
      %116 = vector.load %arg5[%c0_39, %c0_40, %c0_41] : memref<1x1x4xf32, #tpu.memory_space<vmem>>, vector<1x1x4xf32>
      %117 = vector.shape_cast %116 : vector<1x1x4xf32> to vector<1x4xf32>
      %118 = vector.shape_cast %115 : vector<1x4xf32> to vector<1x1x4xf32>
      tpu.vector_store %arg5[%c0_39, %c0_40, %c0_41], %118 {strides = array<i32>} : memref<1x1x4xf32, #tpu.memory_space<vmem>>, vector<1x1x4xf32>,
      %c0_42 = arith.constant 0 : index
      %c0_43 = arith.constant 0 : index
      %c0_44 = arith.constant 0 : index
      %119 = vector.load %arg6[%c0_42, %c0_43, %c0_44] : memref<1x1x4xf32, #tpu.memory_space<vmem>>, vector<1x1x4xf32>
      %120 = vector.shape_cast %119 : vector<1x1x4xf32> to vector<1x4xf32>
      %121 = arith.addf %120, %106 : vector<1x4xf32>
      %c0_45 = arith.constant 0 : index
      %c0_46 = arith.constant 0 : index
      %c0_47 = arith.constant 0 : index
      %122 = vector.load %arg6[%c0_45, %c0_46, %c0_47] : memref<1x1x4xf32, #tpu.memory_space<vmem>>, vector<1x1x4xf32>
      %123 = vector.shape_cast %122 : vector<1x1x4xf32> to vector<1x4xf32>
      %124 = vector.shape_cast %121 : vector<1x4xf32> to vector<1x1x4xf32>
      tpu.vector_store %arg6[%c0_45, %c0_46, %c0_47], %124 {strides = array<i32>} : memref<1x1x4xf32, #tpu.memory_space<vmem>>, vector<1x1x4xf32>,
    } else {
    }
    return
  }
  func.func @transform_0(%arg0: i32, %arg1: i32) -> (i32, i32, i32) {
    %c0_i32 = arith.constant 0 : i32
    %c0_i32_0 = arith.constant 0 : i32
    return %arg0, %c0_i32, %arg1 : i32, i32, i32
  }
  func.func @transform_1(%arg0: i32, %arg1: i32) -> (i32, i32, i32) {
    %c0_i32 = arith.constant 0 : i32
    %c0_i32_0 = arith.constant 0 : i32
    return %arg0, %c0_i32, %arg1 : i32, i32, i32
  }
  func.func @transform_2(%arg0: i32, %arg1: i32) -> (i32, i32, i32) {
    %c0_i32 = arith.constant 0 : i32
    %c0_i32_0 = arith.constant 0 : i32
    %c0_i32_1 = arith.constant 0 : i32
    return %arg0, %c0_i32, %c0_i32_0 : i32, i32, i32
  }
  func.func @transform_3(%arg0: i32, %arg1: i32) -> (i32, i32, i32) {
    %c0_i32 = arith.constant 0 : i32
    %c0_i32_0 = arith.constant 0 : i32
    %c0_i32_1 = arith.constant 0 : i32
    return %arg0, %c0_i32, %c0_i32_0 : i32, i32, i32
  }
  func.func @transform_4(%arg0: i32, %arg1: i32) -> (i32, i32, i32) {
    %c0_i32 = arith.constant 0 : i32
    %c0_i32_0 = arith.constant 0 : i32
    %c0_i32_1 = arith.constant 0 : i32
    return %arg0, %c0_i32, %c0_i32_0 : i32, i32, i32
  }
}

</mosaic_0001>

<llo_original>
// kernel: soft_dice_loss.1
$region0: #{soft_dice_loss.1}
  #allocation0 [shape = 'u32[]', space=smem, size = 0x4, offset = 0x4, fixed_abs, tag = 'smem constant byte address 0x4 - core index']
  #allocation1 [shape = 'u32[72,128]{1,0:T(1,128)}', space=vmem, size = 0x9000, scoped, tag = 'internal scratch']
  %s0 = inlined_call_operand.vmem [shape: f32[2,4,600], index: 0, kind: input, shape index: {}]
  %s1 = inlined_call_operand.vmem [shape: s8[2,1,600], index: 1, kind: input, shape index: {}]
  %s2 = inlined_call_operand.vmem [shape: f32[2,1,4], index: 2, kind: output, shape index: {0}]
  %s3 = inlined_call_operand.vmem [shape: f32[2,1,4], index: 3, kind: output, shape index: {1}]
  %s4 = inlined_call_operand.vmem [shape: f32[2,1,4], index: 4, kind: output, shape index: {2}]
  %5 = xla_tuple %s2, %s3, %s4
  %s6 = sld [smem:[#allocation0]]
  $region69: #{soft_dice_loss.1} parent=0
    _
  %s8 = ssub.s32 1, %s6
  %s9 = scalar_select 0, %s8, %s6
  loop: start=0, step=1, limit=8
  $region2: #{soft_dice_loss.1} parent=0 // loop_pre_header
    _
  $region3: #{soft_dice_loss.1} parent=0 // loop_header
    %s11 = sphi 0, %s15
    %p12 = scmp.ge.s32.totalorder %s11, 8
    %s18 = sphi 0, %s30
    %s19 = sphi 0, %s26
    %s20 = sphi 0, %s18
    %s21 = sphi 0, %s19
    %s22 = sphi 0, %s20
    %s23 = sphi 0, %s21
    %s35 = sphi 0, %s37
    %s38 = sphi 0, %s35
    %s39 = sphi 0, %s38
    %s55 = sphi 0, %s39
    %s63 = sphi 0, %s65
    %s66 = sphi 0, %s63
    %s67 = sphi 0, %s66
    %s83 = sphi 0, %s67
    %s89 = sphi 0, %s91
    %s92 = sphi 0, %s89
    %s93 = sphi 0, %s92
    %s109 = sphi 0, %s93
    %s115 = sphi 0, %s117
    %s118 = sphi 0, %s115
    %s119 = sphi 0, %s118
    %s135 = sphi 0, %s119
    %s141 = sphi 0, %s143
    %s144 = sphi 0, %s141
    %s145 = sphi 0, %s144
    %s161 = sphi 0, %s145
  $region4: #{soft_dice_loss.1} parent=0 // loop_header_branch
    %14 = sbr.rel (%p12) target = $region8
  $region5: #{soft_dice_loss.1} parent=0 // loop_body
    %s16 = ssub.s32 %s11, 1
    %s17 = ssub.s32 %s11, 2
    %s24 = sadd.s32 1, %s19
    %p25 = scmp.ge.s32.totalorder %s24, 3
    %s26 = scalar_select %p25, 0, %s24
    %s27 = sadd.s32 1, %s18
    %s28 = scalar_select %p25, %s27, %s18
    %p29 = scmp.ge.s32.totalorder %s28, 2
    %s30 = scalar_select %p29, 0, %s28
    %s31 = ssub.s32 %s18, %s30
    %s32 = ssub.s32 %s19, %s26
    %s33 = sor.u32 %s31, %s32
    %p34 = scmp.eq.s32.totalorder %s33, 0
    %s36 = sadd.s32 %s35, 1
    %s37 = scalar_select %p34, %s35, %s36
    %p40 = pneg %p34
    %p41 = scmp.eq.s32.totalorder %s11, 5
    %p42 = por %p40, %p41
    %p43 = scmp.ne.s32.totalorder %s35, %s38
    %p44 = scmp.eq.s32.totalorder %s11, 0
    %p45 = por %p43, %p44
    %p46 = scmp.ne.s32.totalorder %s35, %s38
    %p47 = scmp.eq.s32.totalorder %s16, 5
    %p48 = por %p46, %p47
    %p49 = scmp.ne.s32.totalorder %s38, %s39
    %p50 = scmp.eq.s32.totalorder %s16, 0
    %p51 = por %p49, %p50
    %p52 = scmp.ne.s32.totalorder %s38, %s39
    %p53 = scmp.eq.s32.totalorder %s17, 5
    %p54 = por %p52, %p53
    %p56 = scmp.ne.s32.totalorder %s39, %s55
    %p57 = scmp.eq.s32.totalorder %s17, 0
    %p58 = por %p56, %p57
    %s59 = ssub.s32 %s18, %s30
    %s60 = ssub.s32 %s19, %s26
    %s61 = sor.u32 %s59, %s60
    %p62 = scmp.eq.s32.totalorder %s61, 0
    %s64 = sadd.s32 %s63, 1
    %s65 = scalar_select %p62, %s63, %s64
    %p68 = pneg %p62
    %p69 = scmp.eq.s32.totalorder %s11, 5
    %p70 = por %p68, %p69
    %p71 = scmp.ne.s32.totalorder %s63, %s66
    %p72 = scmp.eq.s32.totalorder %s11, 0
    %p73 = por %p71, %p72
    %p74 = scmp.ne.s32.totalorder %s63, %s66
    %p75 = scmp.eq.s32.totalorder %s16, 5
    %p76 = por %p74, %p75
    %p77 = scmp.ne.s32.totalorder %s66, %s67
    %p78 = scmp.eq.s32.totalorder %s16, 0
    %p79 = por %p77, %p78
    %p80 = scmp.ne.s32.totalorder %s66, %s67
    %p81 = scmp.eq.s32.totalorder %s17, 5
    %p82 = por %p80, %p81
    %p84 = scmp.ne.s32.totalorder %s67, %s83
    %p85 = scmp.eq.s32.totalorder %s17, 0
    %p86 = por %p84, %p85
    %s87 = ssub.s32 %s18, %s30
    %p88 = scmp.eq.s32.totalorder %s87, 0
    %s90 = sadd.s32 %s89, 1
    %s91 = scalar_select %p88, %s89, %s90
    %p94 = pneg %p88
    %p95 = scmp.eq.s32.totalorder %s11, 5
    %p96 = por %p94, %p95
    %p97 = scmp.ne.s32.totalorder %s89, %s92
    %p98 = scmp.eq.s32.totalorder %s11, 0
    %p99 = por %p97, %p98
    %p100 = scmp.ne.s32.totalorder %s89, %s92
    %p101 = scmp.eq.s32.totalorder %s16, 5
    %p102 = por %p100, %p101
    %p103 = scmp.ne.s32.totalorder %s92, %s93
    %p104 = scmp.eq.s32.totalorder %s16, 0
    %p105 = por %p103, %p104
    %p106 = scmp.ne.s32.totalorder %s92, %s93
    %p107 = scmp.eq.s32.totalorder %s17, 5
    %p108 = por %p106, %p107
    %p110 = scmp.ne.s32.totalorder %s93, %s109
    %p111 = scmp.eq.s32.totalorder %s17, 0
    %p112 = por %p110, %p111
    %s113 = ssub.s32 %s18, %s30
    %p114 = scmp.eq.s32.totalorder %s113, 0
    %s116 = sadd.s32 %s115, 1
    %s117 = scalar_select %p114, %s115, %s116
    %p120 = pneg %p114
    %p121 = scmp.eq.s32.totalorder %s11, 5
    %p122 = por %p120, %p121
    %p123 = scmp.ne.s32.totalorder %s115, %s118
    %p124 = scmp.eq.s32.totalorder %s11, 0
    %p125 = por %p123, %p124
    %p126 = scmp.ne.s32.totalorder %s115, %s118
    %p127 = scmp.eq.s32.totalorder %s16, 5
    %p128 = por %p126, %p127
    %p129 = scmp.ne.s32.totalorder %s118, %s119
    %p130 = scmp.eq.s32.totalorder %s16, 0
    %p131 = por %p129, %p130
    %p132 = scmp.ne.s32.totalorder %s118, %s119
    %p133 = scmp.eq.s32.totalorder %s17, 5
    %p134 = por %p132, %p133
    %p136 = scmp.ne.s32.totalorder %s119, %s135
    %p137 = scmp.eq.s32.totalorder %s17, 0
    %p138 = por %p136, %p137
    %s139 = ssub.s32 %s18, %s30
    %p140 = scmp.eq.s32.totalorder %s139, 0
    %s142 = sadd.s32 %s141, 1
    %s143 = scalar_select %p140, %s141, %s142
    %p146 = pneg %p140
    %p147 = scmp.eq.s32.totalorder %s11, 5
    %p148 = por %p146, %p147
    %p149 = scmp.ne.s32.totalorder %s141, %s144
    %p150 = scmp.eq.s32.totalorder %s11, 0
    %p151 = por %p149, %p150
    %p152 = scmp.ne.s32.totalorder %s141, %s144
    %p153 = scmp.eq.s32.totalorder %s16, 5
    %p154 = por %p152, %p153
    %p155 = scmp.ne.s32.totalorder %s144, %s145
    %p156 = scmp.eq.s32.totalorder %s16, 0
    %p157 = por %p155, %p156
    %p158 = scmp.ne.s32.totalorder %s144, %s145
    %p159 = scmp.eq.s32.totalorder %s17, 5
    %p160 = por %p158, %p159
    %p162 = scmp.ne.s32.totalorder %s145, %s161
    %p163 = scmp.eq.s32.totalorder %s17, 0
    %p164 = por %p162, %p163
    %p165 = scmp.le.s32.totalorder 1, %s11
    %p166 = scmp.lt.s32.totalorder %s11, 7
    %p167 = pnand %p165, %p166
    %p168 = pneg %p167
    // Predicated region
    $region9: #{soft_dice_loss.1} parent=5 // pred_check
      _
    $region10: #{soft_dice_loss.1} parent=5 // pred_check_branch
      %170 = sbr.rel (%p167) target = $region12
    $region11: #{soft_dice_loss.1} parent=5 // pred_region
      %s171 = ssub.s32 %s11, 1
    $region12: #{soft_dice_loss.1} parent=5 // pred_fallthru
      _
    %p172 = scmp.lt.s32.totalorder %s11, 6
    // Predicated region
    $region13: #{soft_dice_loss.1} parent=5 // pred_check
      %p173 = pneg %p172
    $region14: #{soft_dice_loss.1} parent=5 // pred_check_branch
      %175 = sbr.rel (%p173) target = $region16
    $region15: #{soft_dice_loss.1} parent=5 // pred_region
      // Predicated region
      $region17: #{soft_dice_loss.1} parent=15 // pred_check
        %p176 = pneg %p45
      $region18: #{soft_dice_loss.1} parent=15 // pred_check_branch
        %178 = sbr.rel (%p176) target = $region20
      $region19: #{soft_dice_loss.1} parent=15 // pred_region
        %s179 = smul.u32 2, %s19
        %s180 = ssub.s32 5, %s179
        %p181 = scmp.lt.s32.totalorder %s180, 2
        %s182 = scalar_select %p181, %s180, 2
        %s183 = smul.u32 4, %s182
        %p184 = scmp.lt.s32.totalorder %s18, 1
        %s185 = scalar_select %p184, %s18, 1
        %p186 = scmp.lt.s32.totalorder %s179, 4
        %s187 = scalar_select %p186, %s179, 4
        %s188 = smul.addr %s185, 5
        %s189 = sadd.s32 %s187, %s188
        %s190 = smul.addr %s189, 4
        %s191 = scalar_lea.vmem %s0, %s190
        %s192 = smul.u32 2, %s19
        %s193 = ssub.s32 5, %s192
        %p194 = scmp.lt.s32.totalorder %s193, 2
        %s195 = scalar_select %p194, %s193, 2
        %s196 = smul.u32 4, %s195
      $region20: #{soft_dice_loss.1} parent=15 // pred_fallthru
        _
      // Predicated region
      $region21: #{soft_dice_loss.1} parent=15 // pred_check
        %p197 = pneg %p73
      $region22: #{soft_dice_loss.1} parent=15 // pred_check_branch
        %199 = sbr.rel (%p197) target = $region24
      $region23: #{soft_dice_loss.1} parent=15 // pred_region
        %s200 = smul.u32 2, %s19
        %s201 = ssub.s32 5, %s200
        %p202 = scmp.lt.s32.totalorder %s201, 2
        %s203 = scalar_select %p202, %s201, 2
        %p204 = scmp.lt.s32.totalorder %s18, 1
        %s205 = scalar_select %p204, %s18, 1
        %p206 = scmp.lt.s32.totalorder %s200, 4
        %s207 = scalar_select %p206, %s200, 4
        %s208 = smul.addr %s205, 5
        %s209 = sadd.s32 %s207, %s208
        %s210 = scalar_lea.vmem %s1, %s209
        %s211 = smul.u32 2, %s19
        %s212 = ssub.s32 5, %s211
        %p213 = scmp.lt.s32.totalorder %s212, 2
        %s214 = scalar_select %p213, %s212, 2
      $region24: #{soft_dice_loss.1} parent=15 // pred_fallthru
        _
    $region16: #{soft_dice_loss.1} parent=5 // pred_fallthru
      _
    %p215 = scmp.le.s32.totalorder 1, %s11
    %p216 = scmp.lt.s32.totalorder %s11, 7
    %p217 = pnand %p215, %p216
    %p218 = pneg %p217
    // Predicated region
    $region25: #{soft_dice_loss.1} parent=5 // pred_check
      _
    $region26: #{soft_dice_loss.1} parent=5 // pred_check_branch
      %220 = sbr.rel (%p217) target = $region28
    $region27: #{soft_dice_loss.1} parent=5 // pred_region
      %s221 = ssub.s32 %s11, 1
      %s222 = smul.u32 2, %s21
      %s223 = ssub.s32 5, %s222
      %p224 = scmp.lt.s32.totalorder %s223, 2
      %s225 = scalar_select %p224, %s223, 2
      %s226 = smul.u32 4, %s225
      %p227 = scmp.lt.s32.totalorder %s20, 1
      %s228 = scalar_select %p227, %s20, 1
      %p229 = scmp.lt.s32.totalorder %s222, 4
      %s230 = scalar_select %p229, %s222, 4
      %s231 = smul.addr %s228, 5
      %s232 = sadd.s32 %s230, %s231
      %s233 = smul.addr %s232, 4
      %s234 = scalar_lea.vmem %s0, %s233
      %p235 = pneg %p51
      %p236 = pneg %p48
      %s237 = smul.u32 2, %s21
      %s238 = ssub.s32 5, %s237
      %p239 = scmp.lt.s32.totalorder %s238, 2
      %s240 = scalar_select %p239, %s238, 2
      %p241 = scmp.lt.s32.totalorder %s20, 1
      %s242 = scalar_select %p241, %s20, 1
      %p243 = scmp.lt.s32.totalorder %s237, 4
      %s244 = scalar_select %p243, %s237, 4
      %s245 = smul.addr %s242, 5
      %s246 = sadd.s32 %s244, %s245
      %s247 = scalar_lea.vmem %s1, %s246
      %p248 = pneg %p79
      %p249 = pneg %p76
      %p250 = pneg %p105
      %p251 = pneg %p102
      %p252 = scmp.lt.s32.totalorder %s20, 1
      %s253 = scalar_select %p252, %s20, 1
      %s254 = scalar_lea.vmem %s2, %s253
      %p255 = pneg %p131
      %p256 = pneg %p128
      %p257 = scmp.lt.s32.totalorder %s20, 1
      %s258 = scalar_select %p257, %s20, 1
      %s259 = scalar_lea.vmem %s3, %s258
      %p260 = pneg %p157
      %p261 = pneg %p154
      %p262 = scmp.lt.s32.totalorder %s20, 1
      %s263 = scalar_select %p262, %s20, 1
      %s264 = scalar_lea.vmem %s4, %s263
      %s265 = smul.u32 2, %s21
      %s266 = ssub.s32 5, %s265
      %p267 = scmp.lt.s32.totalorder %s266, 2
      %s268 = scalar_select %p267, %s266, 2
      %s269 = smul.u32 4, %s268
      %p270 = scmp.lt.s32.totalorder %s20, 1
      %s271 = scalar_select %p270, %s20, 1
      %p272 = scmp.lt.s32.totalorder %s265, 4
      %s273 = scalar_select %p272, %s265, 4
      %s274 = smul.addr %s271, 5
      %s275 = sadd.s32 %s273, %s274
      %s276 = smul.addr %s275, 4
      %s277 = scalar_lea.vmem %s0, %s276
      %s278 = smul.u32 2, %s21
      %s279 = ssub.s32 5, %s278
      %p280 = scmp.lt.s32.totalorder %s279, 2
      %s281 = scalar_select %p280, %s279, 2
      %s282 = smul.u32 4, %s281
      %s283 = smul.u32 2, %s21
      %s284 = ssub.s32 5, %s283
      %p285 = scmp.lt.s32.totalorder %s284, 2
      %s286 = scalar_select %p285, %s284, 2
      %p287 = scmp.lt.s32.totalorder %s20, 1
      %s288 = scalar_select %p287, %s20, 1
      %p289 = scmp.lt.s32.totalorder %s283, 4
      %s290 = scalar_select %p289, %s283, 4
      %s291 = smul.addr %s288, 5
      %s292 = sadd.s32 %s290, %s291
      %s293 = scalar_lea.vmem %s1, %s292
      %s294 = smul.u32 2, %s21
      %s295 = ssub.s32 5, %s294
      %p296 = scmp.lt.s32.totalorder %s295, 2
      %s297 = scalar_select %p296, %s295, 2
      %p298 = scmp.lt.s32.totalorder %s20, 1
      %s299 = scalar_select %p298, %s20, 1
      %s300 = scalar_lea.vmem %s2, %s299
      %p301 = scmp.lt.s32.totalorder %s20, 1
      %s302 = scalar_select %p301, %s20, 1
      %s303 = scalar_lea.vmem %s3, %s302
      %p304 = scmp.lt.s32.totalorder %s20, 1
      %s305 = scalar_select %p304, %s20, 1
      %s306 = scalar_lea.vmem %s4, %s305
      %p307 = scmp.eq.s32.totalorder %s21, 0
      // Predicated region
      $region29: #{soft_dice_loss.1} parent=27 // pred_check
        %p308 = pneg %p307
      $region30: #{soft_dice_loss.1} parent=27 // pred_check_branch
        %310 = sbr.rel (%p308) target = $region32
      $region31: #{soft_dice_loss.1} parent=27 // pred_region
        %vm311 = vcmask 24576
        %312 = vst.msk [vmem:[%s300] sm:$0x1] %vm311, 0.0
        %313 = vst.msk [vmem:[%s303] sm:$0x1] %vm311, 0.0
        %314 = vst.msk [vmem:[%s306] sm:$0x1] %vm311, 0.0
      $region32: #{soft_dice_loss.1} parent=27 // pred_fallthru
        _
      %v315 = vlaneseq
      %v316 = vshrl.u32 %v315, 7
      %p317 = scmp.ne.s32.totalorder %s21, 2
      // Predicated region
      $region33: #{soft_dice_loss.1} parent=27 // pred_check
        %p318 = pneg %p317
      $region34: #{soft_dice_loss.1} parent=27 // pred_check_branch
        %320 = sbr.rel (%p318) target = $region36
      $region35: #{soft_dice_loss.1} parent=27 // pred_region
        %v321 = vld [vmem:[%s277] sm:$0xf]
        %v322 = vld [vmem:[%s293] sm:$0x1]
        %v323 = vunpack.c.0.s8 %v322
        %vm324 = vcmask 1043456
        %v325 = vsel %vm324, %v321, -inf
        %v326 = vrot.slane %v325, 4
        %v327 = vmax.f32 %v325, %v326
        %v328 = vrot.slane %v327, 2
        %v329 = vmax.f32 %v327, %v328
        %v330 = vrot.slane %v329, 1
        %v331 = vmax.f32 %v329, %v330
        %v332 = vsub.f32 %v321, %v331
        %v333 = vmul.f32 %v332, 1.442695
        %v334 = vpow.pop %v333
        %v335 = vsel %vm324, %v334, 0.0
        %v336 = vrot.slane %v335, 4
        %v337 = vadd.f32 %v335, %v336
        %v338 = vrot.slane %v337, 2
        %v339 = vadd.f32 %v337, %v338
        %v340 = vrot.slane %v339, 1
        %v341 = vadd.f32 %v339, %v340
        %v342 = vrcp.pop %v341
        %v343 = vmul.f32 %v341, %v342
        %v344 = vsub.f32 1.0, %v343
        %v345 = vmul.f32 %v342, %v344
        %v346 = vadd.f32 %v342, %v345
        %vm347 = vweird.f32 %v341
        %vm348 = vweird.f32 %v342
        %vm349 = vmor %vm347, %vm348
        %v350 = vsel %vm349, %v342, %v346
        %v351 = vand.u32 2147483647, %v341
        %vm352 = vcmp.eq.f32.partialorder %v351, 8.507059e+37
        %v353 = vand.u32 %v341, 2147483648
        %v354 = vor.u32 1.1754944e-38, %v353
        %v355 = vsel %vm352, %v354, %v350
        %v356 = vmul.f32 %v334, %v355
        %v357 = vperm.slane %v323, 0
        %vm358 = vcmp.eq.s32.totalorder %v316, %v357
        %v359 = vsel %vm358, 1, 0
        %v360 = vcvt.s32.f32 %v359
        %v361 = vsel %vm324, %v360, 0.0
        %362 = vadd.xlane.f32.xlu0 %v361
        %v363 = vpop.xlane.xlu0 %362
        %v364 = vsel %vm324, %v356, 0.0
        %365 = vadd.xlane.f32.xlu0 %v364
        %v366 = vpop.xlane.xlu0 %365
        %v367 = vsel %vm358, %v356, 0.0
        %v368 = vsel %vm324, %v367, 0.0
        %369 = vadd.xlane.f32.xlu0 %v368
        %v370 = vpop.xlane.xlu0 %369
        %v371 = vadd.f32 %v363, 0.0
        %v372 = vadd.f32 %v366, 0.0
        %v373 = vadd.f32 %v370, 0.0
        %s374 = scalar_lea.vmem %s277, 4
        %v375 = vld [vmem:[%s374] sm:$0xf]
        %s376 = scalar_lea.vmem %s293, 1
        %v377 = vld [vmem:[%s376] sm:$0x1]
        %v378 = vunpack.c.0.s8 %v377
        %v379 = vsel %vm324, %v375, -inf
        %v380 = vrot.slane %v379, 4
        %v381 = vmax.f32 %v379, %v380
        %v382 = vrot.slane %v381, 2
        %v383 = vmax.f32 %v381, %v382
        %v384 = vrot.slane %v383, 1
        %v385 = vmax.f32 %v383, %v384
        %v386 = vsub.f32 %v375, %v385
        %v387 = vmul.f32 %v386, 1.442695
        %v388 = vpow.pop %v387
        %v389 = vsel %vm324, %v388, 0.0
        %v390 = vrot.slane %v389, 4
        %v391 = vadd.f32 %v389, %v390
        %v392 = vrot.slane %v391, 2
        %v393 = vadd.f32 %v391, %v392
        %v394 = vrot.slane %v393, 1
        %v395 = vadd.f32 %v393, %v394
        %v396 = vrcp.pop %v395
        %v397 = vmul.f32 %v395, %v396
        %v398 = vsub.f32 1.0, %v397
        %v399 = vmul.f32 %v396, %v398
        %v400 = vadd.f32 %v396, %v399
        %vm401 = vweird.f32 %v395
        %vm402 = vweird.f32 %v396
        %vm403 = vmor %vm401, %vm402
        %v404 = vsel %vm403, %v396, %v400
        %v405 = vand.u32 2147483647, %v395
        %vm406 = vcmp.eq.f32.partialorder %v405, 8.507059e+37
        %v407 = vand.u32 %v395, 2147483648
        %v408 = vor.u32 1.1754944e-38, %v407
        %v409 = vsel %vm406, %v408, %v404
        %v410 = vmul.f32 %v388, %v409
        %v411 = vperm.slane %v378, 0
        %vm412 = vcmp.eq.s32.totalorder %v316, %v411
        %v413 = vsel %vm412, 1, 0
        %v414 = vcvt.s32.f32 %v413
        %v415 = vsel %vm324, %v414, 0.0
        %416 = vadd.xlane.f32.xlu0 %v415
        %v417 = vpop.xlane.xlu0 %416
        %v418 = vsel %vm324, %v410, 0.0
        %419 = vadd.xlane.f32.xlu0 %v418
        %v420 = vpop.xlane.xlu0 %419
        %v421 = vsel %vm412, %v410, 0.0
        %v422 = vsel %vm324, %v421, 0.0
        %423 = vadd.xlane.f32.xlu0 %v422
        %v424 = vpop.xlane.xlu0 %423
        %v425 = vadd.f32 %v371, %v417
        %v426 = vadd.f32 %v372, %v420
        %v427 = vadd.f32 %v373, %v424
        %v428 = vld [vmem:[%s300] sm:$0x1]
        %v430 = vperm.slane %v425, 0
        %v431 = vperm.slane %v425, 1
        %v432 = vperm.slane %v425, 2
        %v433 = vperm.slane %v425, 3
        %434 = vst [vmem:[#allocation1] ss:$9 sm:$0xff] %v430
        %s435 = scalar_lea.vmem [#allocation1], 1
        %436 = vst [vmem:[%s435] ss:$9 sm:$0xff] %v431
        %s437 = scalar_lea.vmem [#allocation1], 2
        %438 = vst [vmem:[%s437] ss:$9 sm:$0xff] %v432
        %s439 = scalar_lea.vmem [#allocation1], 3
        %440 = vst [vmem:[%s439] ss:$9 sm:$0xff] %v433
        %v441 = vld [vmem:[#allocation1] sm:$0xff]
        %442 = vset.pattern.permute.xlu0 0
        %443 = vperm.xlu0 %442, %v441
        %v444 = vpop.permute.xlu0 %443
        %v445 = vlaneseq
        %v446 = vand.u32 %v445, 127
        %v447 = vperm.slane %v444, %v446
        %v449 = vadd.f32 %v428, %v447
        %vm450 = vcmask 24576
        %451 = vst.msk [vmem:[%s300] sm:$0x1] %vm450, %v449
        %v452 = vld [vmem:[%s303] sm:$0x1]
        %v454 = vperm.slane %v426, 0
        %v455 = vperm.slane %v426, 1
        %v456 = vperm.slane %v426, 2
        %v457 = vperm.slane %v426, 3
        %458 = vst [vmem:[#allocation1] ss:$9 sm:$0xff] %v454
        %s459 = scalar_lea.vmem [#allocation1], 1
        %460 = vst [vmem:[%s459] ss:$9 sm:$0xff] %v455
        %s461 = scalar_lea.vmem [#allocation1], 2
        %462 = vst [vmem:[%s461] ss:$9 sm:$0xff] %v456
        %s463 = scalar_lea.vmem [#allocation1], 3
        %464 = vst [vmem:[%s463] ss:$9 sm:$0xff] %v457
        %v465 = vld [vmem:[#allocation1] sm:$0xff]
        %466 = vset.pattern.permute.xlu0 0
        %467 = vperm.xlu0 %466, %v465
        %v468 = vpop.permute.xlu0 %467
        %v469 = vperm.slane %v468, %v446
        %v471 = vadd.f32 %v452, %v469
        %472 = vst.msk [vmem:[%s303] sm:$0x1] %vm450, %v471
        %v473 = vld [vmem:[%s306] sm:$0x1]
        %v475 = vperm.slane %v427, 0
        %v476 = vperm.slane %v427, 1
        %v477 = vperm.slane %v427, 2
        %v478 = vperm.slane %v427, 3
        %479 = vst [vmem:[#allocation1] ss:$9 sm:$0xff] %v475
        %s480 = scalar_lea.vmem [#allocation1], 1
        %481 = vst [vmem:[%s480] ss:$9 sm:$0xff] %v476
        %s482 = scalar_lea.vmem [#allocation1], 2
        %483 = vst [vmem:[%s482] ss:$9 sm:$0xff] %v477
        %s484 = scalar_lea.vmem [#allocation1], 3
        %485 = vst [vmem:[%s484] ss:$9 sm:$0xff] %v478
        %v486 = vld [vmem:[#allocation1] sm:$0xff]
        %487 = vset.pattern.permute.xlu0 0
        %488 = vperm.xlu0 %487, %v486
        %v489 = vpop.permute.xlu0 %488
        %v490 = vperm.slane %v489, %v446
        %v492 = vadd.f32 %v473, %v490
        %493 = vst.msk [vmem:[%s306] sm:$0x1] %vm450, %v492
      $region36: #{soft_dice_loss.1} parent=27 // pred_fallthru
        _
      %p494 = scmp.eq.s32.totalorder %s21, 2
      // Predicated region
      $region37: #{soft_dice_loss.1} parent=27 // pred_check
        %p495 = pneg %p494
      $region38: #{soft_dice_loss.1} parent=27 // pred_check_branch
        %497 = sbr.rel (%p495) target = $region40
      $region39: #{soft_dice_loss.1} parent=27 // pred_region
        %v498 = vld [vmem:[%s277] sm:$0xf]
        %v499 = vld [vmem:[%s293] sm:$0x1]
        %v500 = vunpack.c.0.s8 %v499
        %vm501 = vcmask 1043456
        %v502 = vsel %vm501, %v498, -inf
        %v503 = vrot.slane %v502, 4
        %v504 = vmax.f32 %v502, %v503
        %v505 = vrot.slane %v504, 2
        %v506 = vmax.f32 %v504, %v505
        %v507 = vrot.slane %v506, 1
        %v508 = vmax.f32 %v506, %v507
        %v509 = vsub.f32 %v498, %v508
        %v510 = vmul.f32 %v509, 1.442695
        %v511 = vpow.pop %v510
        %v512 = vsel %vm501, %v511, 0.0
        %v513 = vrot.slane %v512, 4
        %v514 = vadd.f32 %v512, %v513
        %v515 = vrot.slane %v514, 2
        %v516 = vadd.f32 %v514, %v515
        %v517 = vrot.slane %v516, 1
        %v518 = vadd.f32 %v516, %v517
        %v519 = vrcp.pop %v518
        %v520 = vmul.f32 %v518, %v519
        %v521 = vsub.f32 1.0, %v520
        %v522 = vmul.f32 %v519, %v521
        %v523 = vadd.f32 %v519, %v522
        %vm524 = vweird.f32 %v518
        %vm525 = vweird.f32 %v519
        %vm526 = vmor %vm524, %vm525
        %v527 = vsel %vm526, %v519, %v523
        %v528 = vand.u32 2147483647, %v518
        %vm529 = vcmp.eq.f32.partialorder %v528, 8.507059e+37
        %v530 = vand.u32 %v518, 2147483648
        %v531 = vor.u32 1.1754944e-38, %v530
        %v532 = vsel %vm529, %v531, %v527
        %v533 = vmul.f32 %v511, %v532
        %v534 = vperm.slane %v500, 0
        %vm535 = vcmp.eq.s32.totalorder %v316, %v534
        %v536 = vlaneseq
        %v537 = vand.u32 %v536, 127
        %s538 = smul.u32 %s21, 256
        %s539 = sadd.s32 %s538, 0
        %v540 = vstv %s539
        %v541 = vadd.s32 %v540, %v537
        %vm542 = vcmp.lt.s32.totalorder %v541, 600
        %v543 = vsel %vm542, 1, 0
        %vm544 = vcmp.eq.s32.totalorder %v543, 1
        %vm545 = vmand %vm535, %vm544
        %v546 = vsel %vm544, %v533, 0.0
        %v547 = vsel %vm545, 1, 0
        %v548 = vcvt.s32.f32 %v547
        %v549 = vsel %vm501, %v548, 0.0
        %550 = vadd.xlane.f32.xlu0 %v549
        %v551 = vpop.xlane.xlu0 %550
        %v552 = vsel %vm501, %v546, 0.0
        %553 = vadd.xlane.f32.xlu0 %v552
        %v554 = vpop.xlane.xlu0 %553
        %v555 = vsel %vm545, %v533, 0.0
        %v556 = vsel %vm501, %v555, 0.0
        %557 = vadd.xlane.f32.xlu0 %v556
        %v558 = vpop.xlane.xlu0 %557
        %v559 = vadd.f32 %v551, 0.0
        %v560 = vadd.f32 %v554, 0.0
        %v561 = vadd.f32 %v558, 0.0
        %s562 = scalar_lea.vmem %s277, 4
        %v563 = vld [vmem:[%s562] sm:$0xf]
        %s564 = scalar_lea.vmem %s293, 1
        %v565 = vld [vmem:[%s564] sm:$0x1]
        %v566 = vunpack.c.0.s8 %v565
        %v567 = vsel %vm501, %v563, -inf
        %v568 = vrot.slane %v567, 4
        %v569 = vmax.f32 %v567, %v568
        %v570 = vrot.slane %v569, 2
        %v571 = vmax.f32 %v569, %v570
        %v572 = vrot.slane %v571, 1
        %v573 = vmax.f32 %v571, %v572
        %v574 = vsub.f32 %v563, %v573
        %v575 = vmul.f32 %v574, 1.442695
        %v576 = vpow.pop %v575
        %v577 = vsel %vm501, %v576, 0.0
        %v578 = vrot.slane %v577, 4
        %v579 = vadd.f32 %v577, %v578
        %v580 = vrot.slane %v579, 2
        %v581 = vadd.f32 %v579, %v580
        %v582 = vrot.slane %v581, 1
        %v583 = vadd.f32 %v581, %v582
        %v584 = vrcp.pop %v583
        %v585 = vmul.f32 %v583, %v584
        %v586 = vsub.f32 1.0, %v585
        %v587 = vmul.f32 %v584, %v586
        %v588 = vadd.f32 %v584, %v587
        %vm589 = vweird.f32 %v583
        %vm590 = vweird.f32 %v584
        %vm591 = vmor %vm589, %vm590
        %v592 = vsel %vm591, %v584, %v588
        %v593 = vand.u32 2147483647, %v583
        %vm594 = vcmp.eq.f32.partialorder %v593, 8.507059e+37
        %v595 = vand.u32 %v583, 2147483648
        %v596 = vor.u32 1.1754944e-38, %v595
        %v597 = vsel %vm594, %v596, %v592
        %v598 = vmul.f32 %v576, %v597
        %v599 = vperm.slane %v566, 0
        %vm600 = vcmp.eq.s32.totalorder %v316, %v599
        %s601 = sadd.s32 %s538, 128
        %v602 = vstv %s601
        %v603 = vadd.s32 %v602, %v537
        %vm604 = vcmp.lt.s32.totalorder %v603, 600
        %v605 = vsel %vm604, 1, 0
        %vm606 = vcmp.eq.s32.totalorder %v605, 1
        %vm607 = vmand %vm600, %vm606
        %v608 = vsel %vm606, %v598, 0.0
        %v609 = vsel %vm607, 1, 0
        %v610 = vcvt.s32.f32 %v609
        %v611 = vsel %vm501, %v610, 0.0
        %612 = vadd.xlane.f32.xlu0 %v611
        %v613 = vpop.xlane.xlu0 %612
        %v614 = vsel %vm501, %v608, 0.0
        %615 = vadd.xlane.f32.xlu0 %v614
        %v616 = vpop.xlane.xlu0 %615
        %v617 = vsel %vm607, %v598, 0.0
        %v618 = vsel %vm501, %v617, 0.0
        %619 = vadd.xlane.f32.xlu0 %v618
        %v620 = vpop.xlane.xlu0 %619
        %v621 = vadd.f32 %v559, %v613
        %v622 = vadd.f32 %v560, %v616
        %v623 = vadd.f32 %v561, %v620
        %v624 = vld [vmem:[%s300] sm:$0x1]
        %v626 = vperm.slane %v621, 0
        %v627 = vperm.slane %v621, 1
        %v628 = vperm.slane %v621, 2
        %v629 = vperm.slane %v621, 3
        %630 = vst [vmem:[#allocation1] ss:$9 sm:$0xff] %v626
        %s631 = scalar_lea.vmem [#allocation1], 1
        %632 = vst [vmem:[%s631] ss:$9 sm:$0xff] %v627
        %s633 = scalar_lea.vmem [#allocation1], 2
        %634 = vst [vmem:[%s633] ss:$9 sm:$0xff] %v628
        %s635 = scalar_lea.vmem [#allocation1], 3
        %636 = vst [vmem:[%s635] ss:$9 sm:$0xff] %v629
        %v637 = vld [vmem:[#allocation1] sm:$0xff]
        %638 = vset.pattern.permute.xlu0 0
        %639 = vperm.xlu0 %638, %v637
        %v640 = vpop.permute.xlu0 %639
        %v641 = vperm.slane %v640, %v537
        %v643 = vadd.f32 %v624, %v641
        %vm644 = vcmask 24576
        %645 = vst.msk [vmem:[%s300] sm:$0x1] %vm644, %v643
        %v646 = vld [vmem:[%s303] sm:$0x1]
        %v648 = vperm.slane %v622, 0
        %v649 = vperm.slane %v622, 1
        %v650 = vperm.slane %v622, 2
        %v651 = vperm.slane %v622, 3
        %652 = vst [vmem:[#allocation1] ss:$9 sm:$0xff] %v648
        %s653 = scalar_lea.vmem [#allocation1], 1
        %654 = vst [vmem:[%s653] ss:$9 sm:$0xff] %v649
        %s655 = scalar_lea.vmem [#allocation1], 2
        %656 = vst [vmem:[%s655] ss:$9 sm:$0xff] %v650
        %s657 = scalar_lea.vmem [#allocation1], 3
        %658 = vst [vmem:[%s657] ss:$9 sm:$0xff] %v651
        %v659 = vld [vmem:[#allocation1] sm:$0xff]
        %660 = vset.pattern.permute.xlu0 0
        %661 = vperm.xlu0 %660, %v659
        %v662 = vpop.permute.xlu0 %661
        %v663 = vperm.slane %v662, %v537
        %v665 = vadd.f32 %v646, %v663
        %666 = vst.msk [vmem:[%s303] sm:$0x1] %vm644, %v665
        %v667 = vld [vmem:[%s306] sm:$0x1]
        %v669 = vperm.slane %v623, 0
        %v670 = vperm.slane %v623, 1
        %v671 = vperm.slane %v623, 2
        %v672 = vperm.slane %v623, 3
        %673 = vst [vmem:[#allocation1] ss:$9 sm:$0xff] %v669
        %s674 = scalar_lea.vmem [#allocation1], 1
        %675 = vst [vmem:[%s674] ss:$9 sm:$0xff] %v670
        %s676 = scalar_lea.vmem [#allocation1], 2
        %677 = vst [vmem:[%s676] ss:$9 sm:$0xff] %v671
        %s678 = scalar_lea.vmem [#allocation1], 3
        %679 = vst [vmem:[%s678] ss:$9 sm:$0xff] %v672
        %v680 = vld [vmem:[#allocation1] sm:$0xff]
        %681 = vset.pattern.permute.xlu0 0
        %682 = vperm.xlu0 %681, %v680
        %v683 = vpop.permute.xlu0 %682
        %v684 = vperm.slane %v683, %v537
        %v686 = vadd.f32 %v667, %v684
        %687 = vst.msk [vmem:[%s306] sm:$0x1] %vm644, %v686
      $region40: #{soft_dice_loss.1} parent=27 // pred_fallthru
        _
      %p688 = scmp.lt.s32.totalorder %s20, 1
      %s689 = scalar_select %p688, %s20, 1
      %s690 = scalar_lea.vmem %s2, %s689
      %p691 = scmp.lt.s32.totalorder %s20, 1
      %s692 = scalar_select %p691, %s20, 1
      %s693 = scalar_lea.vmem %s3, %s692
      %p694 = scmp.lt.s32.totalorder %s20, 1
      %s695 = scalar_select %p694, %s20, 1
      %s696 = scalar_lea.vmem %s4, %s695
      // Predicated region
      $region41: #{soft_dice_loss.1} parent=27 // pred_check
        %p697 = pneg %p102
      $region42: #{soft_dice_loss.1} parent=27 // pred_check_branch
        %699 = sbr.rel (%p697) target = $region44
      $region43: #{soft_dice_loss.1} parent=27 // pred_region
        _
      $region44: #{soft_dice_loss.1} parent=27 // pred_fallthru
        _
      // Predicated region
      $region45: #{soft_dice_loss.1} parent=27 // pred_check
        %p700 = pneg %p128
      $region46: #{soft_dice_loss.1} parent=27 // pred_check_branch
        %702 = sbr.rel (%p700) target = $region48
      $region47: #{soft_dice_loss.1} parent=27 // pred_region
        _
      $region48: #{soft_dice_loss.1} parent=27 // pred_fallthru
        _
      // Predicated region
      $region49: #{soft_dice_loss.1} parent=27 // pred_check
        %p703 = pneg %p154
      $region50: #{soft_dice_loss.1} parent=27 // pred_check_branch
        %705 = sbr.rel (%p703) target = $region52
      $region51: #{soft_dice_loss.1} parent=27 // pred_region
        _
      $region52: #{soft_dice_loss.1} parent=27 // pred_fallthru
        _
    $region28: #{soft_dice_loss.1} parent=5 // pred_fallthru
      _
    %p706 = scmp.le.s32.totalorder 2, %s11
    // Predicated region
    $region53: #{soft_dice_loss.1} parent=5 // pred_check
      %p707 = pneg %p706
    $region54: #{soft_dice_loss.1} parent=5 // pred_check_branch
      %709 = sbr.rel (%p707) target = $region56
    $region55: #{soft_dice_loss.1} parent=5 // pred_region
      %s710 = ssub.s32 %s11, 2
      // Predicated region
      $region57: #{soft_dice_loss.1} parent=55 // pred_check
        %p711 = pneg %p108
      $region58: #{soft_dice_loss.1} parent=55 // pred_check_branch
        %713 = sbr.rel (%p711) target = $region60
      $region59: #{soft_dice_loss.1} parent=55 // pred_region
        %p714 = scmp.lt.s32.totalorder %s22, 1
        %s715 = scalar_select %p714, %s22, 1
        %s716 = scalar_lea.vmem %s2, %s715
      $region60: #{soft_dice_loss.1} parent=55 // pred_fallthru
        _
      // Predicated region
      $region61: #{soft_dice_loss.1} parent=55 // pred_check
        %p717 = pneg %p134
      $region62: #{soft_dice_loss.1} parent=55 // pred_check_branch
        %719 = sbr.rel (%p717) target = $region64
      $region63: #{soft_dice_loss.1} parent=55 // pred_region
        %p720 = scmp.lt.s32.totalorder %s22, 1
        %s721 = scalar_select %p720, %s22, 1
        %s722 = scalar_lea.vmem %s3, %s721
      $region64: #{soft_dice_loss.1} parent=55 // pred_fallthru
        _
      // Predicated region
      $region65: #{soft_dice_loss.1} parent=55 // pred_check
        %p723 = pneg %p160
      $region66: #{soft_dice_loss.1} parent=55 // pred_check_branch
        %725 = sbr.rel (%p723) target = $region68
      $region67: #{soft_dice_loss.1} parent=55 // pred_region
        %p726 = scmp.lt.s32.totalorder %s22, 1
        %s727 = scalar_select %p726, %s22, 1
        %s728 = scalar_lea.vmem %s4, %s727
      $region68: #{soft_dice_loss.1} parent=55 // pred_fallthru
        _
    $region56: #{soft_dice_loss.1} parent=5 // pred_fallthru
      _
  $region6: #{soft_dice_loss.1} parent=0 // loop_footer
    %s15 = sadd.s32 1, %s11
  $region7: #{soft_dice_loss.1} parent=0 // loop_footer_branch
    %10 = sbr.rel target = $region3
  $region8: #{soft_dice_loss.1} parent=0 // loop_exit
    _

</llo_original>
